<compile_context>
chip_gen: v5e
topology: v5e:2x2
jax: 0.10.0
libtpu: 0.0.40
codegen_flags: <defaults>
</compile_context>

<pallas_src>
import functools

import jax
import jax.numpy as jnp
from jax.experimental import pallas as pl
from jax.experimental.pallas import tpu as pltpu


def poly_kernel(w_ref, x_ref, o_ref, *, degree):
    """o = sum_i w[i] * x**i via Horner's rule over one (br, bc) block of x.

    w_ref: (degree,) f32 scalars resident in SMEM.
    x_ref / o_ref: (br, bc) VMEM blocks in the caller's dtype (f32 math inside).
    """
    x = x_ref[...].astype(jnp.float32)
    w = [w_ref[i] for i in range(degree)]          # hoist SMEM scalar reads
    if degree == 1:
        acc = jnp.zeros_like(x) + w[0]
    else:
        acc = x * w[degree - 1] + w[degree - 2]    # no full-size constant splat
        for i in range(degree - 3, -1, -1):        # static unroll: acc = acc*x + w[i]
            acc = acc * x + w[i]
    o_ref[...] = acc.astype(o_ref.dtype)


def _poly_jnp(x, w, degree):
    """Plain-jnp Horner for the <128-element ragged tail / tiny inputs."""
    x = x.astype(jnp.float32)
    acc = jnp.zeros_like(x) + w[degree - 1]
    for i in range(degree - 2, -1, -1):
        acc = acc * x + w[i]
    return acc


def _pick_cols(n_main, block_cols):
    """Widest multiple-of-128 divisor of n_main that is <= block_cols (lane-dense)."""
    m = n_main // 128
    for d in range(min(m, block_cols // 128), 0, -1):
        if m % d == 0:
            return 128 * d
    return 128


def polynomial_forward(x, weights, *, block_rows=512, block_cols=1024, target_steps=4):
    """PolynomialLayer.forward: y[j] = sum_i weights[0, i] * x[j]**i, preserving x.dtype."""
    degree = weights.shape[1]
    n = x.shape[0]
    out_dtype = x.dtype
    w = weights.reshape(-1).astype(jnp.float32)    # (degree,) scalars for SMEM

    if degree == 0:
        return jnp.zeros((n,), out_dtype)

    n_main = (n // 128) * 128
    if n_main == 0:
        # Tiny input: no lane-dense tile possible; evaluate directly.
        return _poly_jnp(x, w, degree).astype(out_dtype)

    # ---- lane-aligned prefix through the kernel (copy-free reshape) ----
    bc = _pick_cols(n_main, block_cols)
    rows = n_main // bc

    # Row tile: >= target_steps balanced multiple-of-8 blocks once rows > 8
    # (2 TensorCores on v7x, DMA-in/out overlap on v5e/v6e), capped so a block
    # is at most (512, 1024) f32 = 2 MiB -> 8 MiB double-buffered in+out.
    if rows <= 8:
        br = rows
    else:
        br = min(block_rows, 8 * pl.cdiv(pl.cdiv(rows, target_steps), 8))
    grid = (pl.cdiv(rows, br),)

    if n_main == n:
        x2 = x.reshape(rows, bc)                   # copy-free
    else:
        # TODO(synk): the prefix slice still materializes one copy under XLA; a
        # fully copy-free ragged path would need masked stores over the
        # un-padded 1-D input (length passed as an SMEM scalar).
        x2 = x[:n_main].reshape(rows, bc)

    main = pl.pallas_call(
        functools.partial(poly_kernel, degree=degree),
        out_shape=jax.ShapeDtypeStruct((rows, bc), out_dtype),
        grid=grid,
        in_specs=[
            # TODO(synk): review suggested scalar prefetch for w; kept as a
            # whole-array SMEM operand (proven lowering for f32 scalars) since
            # the coefficient copy is perf-neutral for this HBM-bound kernel.
            pl.BlockSpec(memory_space=pltpu.SMEM),
            pl.BlockSpec((br, bc), lambda j: (j, 0)),
        ],
        out_specs=pl.BlockSpec((br, bc), lambda j: (j, 0)),
        compiler_params=pltpu.CompilerParams(
            dimension_semantics=("parallel",)),    # shard row tiles across v7x TCs
    )(w, x2)

    main_flat = main.reshape(-1)                   # copy-free
    if n_main == n:
        return main_flat

    # Ragged tail (< 128 elements): plain jnp, no whole-array pad / output slice.
    tail = _poly_jnp(x[n_main:], w, degree).astype(out_dtype)
    return jnp.concatenate([main_flat, tail])


def polynomial_reference(x, weights):
    """Pure-JAX mirror of the torch forward (power sum), in f32."""
    degree = weights.shape[1]
    xf = x.astype(jnp.float32)
    x_array = jnp.stack([xf ** i for i in range(degree)], axis=1)
    return jnp.sum(x_array * weights.astype(jnp.float32), axis=1)


if __name__ == "__main__":
    degree = 4
    scale = 1.0

    key = jax.random.PRNGKey(0)
    k_w, k_x1, k_x2, k_x3 = jax.random.split(key, 4)

    # Deterministic stand-in for torch.randn(1, degree) * scale.
    weights = jax.random.normal(k_w, (1, degree), dtype=jnp.float32) * scale

    # Case 1: lane-aligned f32 input -> copy-free reshape, 4-step balanced grid.
    x_big = jax.random.normal(k_x1, (65536,), dtype=jnp.float32)
    y_big = jax.block_until_ready(polynomial_forward(x_big, weights))
    assert y_big.shape == (65536,) and y_big.dtype == jnp.float32
    assert jnp.allclose(y_big, polynomial_reference(x_big, weights), atol=1e-3, rtol=1e-4)

    # Case 2: ragged length -> kernel on the 128-aligned prefix + jnp tail.
    x_rag = jax.random.normal(k_x2, (1000,), dtype=jnp.float32)
    y_rag = jax.block_until_ready(polynomial_forward(x_rag, weights))
    assert y_rag.shape == (1000,)
    assert jnp.allclose(y_rag, polynomial_reference(x_rag, weights), atol=1e-3, rtol=1e-4)

    # Case 3: tiny input (< 128 elements) -> pure-jnp fallback path.
    x_tiny = jax.random.normal(k_x3, (8,), dtype=jnp.float32)
    y_tiny = jax.block_until_ready(polynomial_forward(x_tiny, weights))
    assert y_tiny.shape == (8,)
    assert jnp.allclose(y_tiny, polynomial_reference(x_tiny, weights), atol=1e-3, rtol=1e-4)

    # Case 4: bf16 I/O preserved (f32 math inside the kernel).
    x_bf16 = jax.random.normal(k_x1, (4096,), dtype=jnp.float32).astype(jnp.bfloat16)
    y_bf16 = jax.block_until_ready(polynomial_forward(x_bf16, weights))
    assert y_bf16.shape == (4096,) and y_bf16.dtype == jnp.bfloat16
    assert jnp.allclose(y_bf16.astype(jnp.float32),
                        polynomial_reference(x_bf16, weights),
                        atol=5e-2, rtol=2e-2)

    print("KERNEL_OK")
</pallas_src>

<mosaic_0001>
module attributes {stable_mosaic.version = 11 : i64} {
  func.func @poly_kernel(%arg0: i32, %arg1: memref<4xf32, #tpu.memory_space<smem>>, %arg2: memref<16x1024xf32, #tpu.memory_space<vmem>>, %arg3: memref<16x1024xf32, #tpu.memory_space<vmem>>) attributes {dimension_semantics = [#tpu.dimension_semantics<parallel>], iteration_bounds = array<i64: 4>, scalar_prefetch = 0 : i64, scratch_operands = 0 : i64, tpu.core_type = #tpu.core_type<tc>, window_params = [{transform_indices = @transform_0, window_bounds = array<i64: 4>}, {transform_indices = @transform_1, window_bounds = array<i64: 16, 1024>}, {transform_indices = @transform_2, window_bounds = array<i64: 16, 1024>}]} {
    %c0 = arith.constant 0 : index
    %c0_0 = arith.constant 0 : index
    %0 = vector.load %arg2[%c0, %c0_0] : memref<16x1024xf32, #tpu.memory_space<vmem>>, vector<16x1024xf32>
    %c0_1 = arith.constant 0 : index
    %1 = memref.load %arg1[%c0_1] : memref<4xf32, #tpu.memory_space<smem>>
    %c1 = arith.constant 1 : index
    %2 = memref.load %arg1[%c1] : memref<4xf32, #tpu.memory_space<smem>>
    %c2 = arith.constant 2 : index
    %3 = memref.load %arg1[%c2] : memref<4xf32, #tpu.memory_space<smem>>
    %c3 = arith.constant 3 : index
    %4 = memref.load %arg1[%c3] : memref<4xf32, #tpu.memory_space<smem>>
    %5 = vector.broadcast %4 : f32 to vector<16x1024xf32>
    %6 = arith.mulf %0, %5 : vector<16x1024xf32>
    %7 = vector.broadcast %3 : f32 to vector<16x1024xf32>
    %8 = arith.addf %6, %7 : vector<16x1024xf32>
    %9 = arith.mulf %8, %0 : vector<16x1024xf32>
    %10 = vector.broadcast %2 : f32 to vector<16x1024xf32>
    %11 = arith.addf %9, %10 : vector<16x1024xf32>
    %12 = arith.mulf %11, %0 : vector<16x1024xf32>
    %13 = vector.broadcast %1 : f32 to vector<16x1024xf32>
    %14 = arith.addf %12, %13 : vector<16x1024xf32>
    %c0_2 = arith.constant 0 : index
    %c0_3 = arith.constant 0 : index
    %15 = vector.load %arg3[%c0_2, %c0_3] : memref<16x1024xf32, #tpu.memory_space<vmem>>, vector<16x1024xf32>
    tpu.vector_store %arg3[%c0_2, %c0_3], %14 {strides = array<i32>} : memref<16x1024xf32, #tpu.memory_space<vmem>>, vector<16x1024xf32>,
    return
  }
  func.func @transform_0(%arg0: i32) -> i32 {
    %c0_i32 = arith.constant 0 : i32
    %c0_i32_0 = arith.constant 0 : i32
    return %c0_i32 : i32
  }
  func.func @transform_1(%arg0: i32) -> (i32, i32) {
    %c0_i32 = arith.constant 0 : i32
    %c0_i32_0 = arith.constant 0 : i32
    return %arg0, %c0_i32 : i32, i32
  }
  func.func @transform_2(%arg0: i32) -> (i32, i32) {
    %c0_i32 = arith.constant 0 : i32
    %c0_i32_0 = arith.constant 0 : i32
    return %arg0, %c0_i32 : i32, i32
  }
}

</mosaic_0001>

<llo_original>
// kernel: tpu_custom_call.1
$region0: #{tpu_custom_call.1}
  #allocation0 [shape = 'u32[]', space=smem, size = 0x4, offset = 0x4, fixed_abs, tag = 'smem constant byte address 0x4 - core index']
  #allocation1 [shape = 'u32[72,128]{1,0:T(1,128)}', space=vmem, size = 0x9000, scoped, tag = 'internal scratch']
  %s0 = inlined_call_operand.hbm [shape: f32[4], index: 0, kind: input, shape index: {}]
  %s1 = inlined_call_operand.hbm [shape: f32[64,1024], index: 1, kind: input, shape index: {}]
  %s2 = inlined_call_operand.hbm [shape: f32[64,1024], index: 2, kind: output, shape index: {}]
  %s3 = sld [smem:[#allocation0]]
  $region49: #{tpu_custom_call.1} parent=0
    _
  %s5 = ssub.s32 1, %s3
  %s6 = scalar_select 0, %s5, %s3
  $region1: #{tpu_custom_call.1} parent=0
    #allocation2 [shape = 'u8[512]{0}', space=smem, size = 0x200, scoped, tag = 'input window, operand 0, single buffered']
    #allocation3 [shape = 's32[2]{0}', space=sflag, size = 0x8, scoped, tag = 'scoped memory for tpu_custom_call.1']
    #allocation4 [shape = 's32[2]{0}', space=sflag, size = 0x8, scoped, tag = 'scoped memory for tpu_custom_call.1']
    #allocation5 [shape = 's32[2]{0}', space=sflag, size = 0x8, scoped, tag = 'scoped memory for tpu_custom_call.1']
    #allocation6 [shape = 'u8[131072]{0}', space=vmem, size = 0x20000, scoped, tag = 'input window, operand 1']
    #allocation7 [shape = 'u8[131072]{0}', space=vmem, size = 0x20000, scoped, tag = 'output window, operand 0']
    %7 = vsyncpa [#allocation5], 0
    %8 = vsyncpa [#allocation3], 0
    %s9 = scalar_lea.sflag [#allocation3], 1
    %10 = vsyncpa %s9, 0
    %11 = vsyncpa [#allocation4], 0
    %s12 = scalar_lea.sflag [#allocation4], 1
    %13 = vsyncpa %s12, 0
    loop: start=0, step=1, limit=6
    $region2: #{tpu_custom_call.1} parent=1 // loop_pre_header
      _
    $region3: #{tpu_custom_call.1} parent=1 // loop_header
      %s15 = sphi 0, %s19
      %p16 = scmp.ge.s32.totalorder %s15, 6
      %s23 = sphi 0, %s23
      %s25 = sphi 0, %s23
      %s26 = sphi 0, %s25
      %s40 = sphi 0, %s26
      %s46 = sphi 0, %s48
      %s49 = sphi 0, %s46
      %s50 = sphi 0, %s49
      %s66 = sphi 0, %s50
      %s72 = sphi 0, %s74
      %s75 = sphi 0, %s72
      %s76 = sphi 0, %s75
      %s92 = sphi 0, %s76
    $region4: #{tpu_custom_call.1} parent=1 // loop_header_branch
      %18 = sbr.rel (%p16) target = $region8
    $region5: #{tpu_custom_call.1} parent=1 // loop_body
      %s20 = ssub.s32 %s15, 1
      %s21 = ssub.s32 %s15, 2
      %s22 = sadd.s32 %s15, 1
      %s24 = sadd.s32 %s23, 1
      %p27 = scmp.eq.s32.totalorder %s15, 3
      %p28 = scmp.ne.s32.totalorder %s23, %s25
      %p29 = scmp.eq.s32.totalorder %s15, 0
      %p30 = por %p28, %p29
      %p31 = scmp.ne.s32.totalorder %s23, %s25
      %p32 = scmp.eq.s32.totalorder %s20, 3
      %p33 = por %p31, %p32
      %p34 = scmp.ne.s32.totalorder %s25, %s26
      %p35 = scmp.eq.s32.totalorder %s20, 0
      %p36 = por %p34, %p35
      %p37 = scmp.ne.s32.totalorder %s25, %s26
      %p38 = scmp.eq.s32.totalorder %s21, 3
      %p39 = por %p37, %p38
      %p41 = scmp.ne.s32.totalorder %s26, %s40
      %p42 = scmp.eq.s32.totalorder %s21, 0
      %p43 = por %p41, %p42
      %s44 = ssub.s32 %s15, %s22
      %p45 = scmp.eq.s32.totalorder %s44, 0
      %s47 = sadd.s32 %s46, 1
      %s48 = scalar_select %p45, %s46, %s47
      %p51 = pneg %p45
      %p52 = scmp.eq.s32.totalorder %s15, 3
      %p53 = por %p51, %p52
      %p54 = scmp.ne.s32.totalorder %s46, %s49
      %p55 = scmp.eq.s32.totalorder %s15, 0
      %p56 = por %p54, %p55
      %p57 = scmp.ne.s32.totalorder %s46, %s49
      %p58 = scmp.eq.s32.totalorder %s20, 3
      %p59 = por %p57, %p58
      %p60 = scmp.ne.s32.totalorder %s49, %s50
      %p61 = scmp.eq.s32.totalorder %s20, 0
      %p62 = por %p60, %p61
      %p63 = scmp.ne.s32.totalorder %s49, %s50
      %p64 = scmp.eq.s32.totalorder %s21, 3
      %p65 = por %p63, %p64
      %p67 = scmp.ne.s32.totalorder %s50, %s66
      %p68 = scmp.eq.s32.totalorder %s21, 0
      %p69 = por %p67, %p68
      %s70 = ssub.s32 %s15, %s22
      %p71 = scmp.eq.s32.totalorder %s70, 0
      %s73 = sadd.s32 %s72, 1
      %s74 = scalar_select %p71, %s72, %s73
      %p77 = pneg %p71
      %p78 = scmp.eq.s32.totalorder %s15, 3
      %p79 = por %p77, %p78
      %p80 = scmp.ne.s32.totalorder %s72, %s75
      %p81 = scmp.eq.s32.totalorder %s15, 0
      %p82 = por %p80, %p81
      %p83 = scmp.ne.s32.totalorder %s72, %s75
      %p84 = scmp.eq.s32.totalorder %s20, 3
      %p85 = por %p83, %p84
      %p86 = scmp.ne.s32.totalorder %s75, %s76
      %p87 = scmp.eq.s32.totalorder %s20, 0
      %p88 = por %p86, %p87
      %p89 = scmp.ne.s32.totalorder %s75, %s76
      %p90 = scmp.eq.s32.totalorder %s21, 3
      %p91 = por %p89, %p90
      %p93 = scmp.ne.s32.totalorder %s76, %s92
      %p94 = scmp.eq.s32.totalorder %s21, 0
      %p95 = por %p93, %p94
      %p96 = scmp.le.s32.totalorder 1, %s15
      %p97 = scmp.lt.s32.totalorder %s15, 5
      %p98 = pnand %p96, %p97
      %p99 = pneg %p98
      // Predicated region
      $region9: #{tpu_custom_call.1} parent=5 // pred_check
        _
      $region10: #{tpu_custom_call.1} parent=5 // pred_check_branch
        %101 = sbr.rel (%p98) target = $region12
      $region11: #{tpu_custom_call.1} parent=5 // pred_region
        %s102 = ssub.s32 %s15, 1
        // Predicated region
        $region13: #{tpu_custom_call.1} parent=11 // pred_check
          %p103 = pneg %p36
        $region14: #{tpu_custom_call.1} parent=11 // pred_check_branch
          %105 = sbr.rel (%p103) target = $region16
        $region15: #{tpu_custom_call.1} parent=11 // pred_region
          %107 = vsyncadd [#allocation5], 0
          %s109 = sshll.u32 %s0, 4
          %s110 = int_to_ptr.hbm [resolvable:$true] %s109
          %112 = dma.hbm_to_smem %s110, 16, [#allocation2], [#allocation5]
        $region16: #{tpu_custom_call.1} parent=11 // pred_fallthru
          _
      $region12: #{tpu_custom_call.1} parent=5 // pred_fallthru
        _
      %p113 = scmp.lt.s32.totalorder %s15, 4
      // Predicated region
      $region17: #{tpu_custom_call.1} parent=5 // pred_check
        %p114 = pneg %p113
      $region18: #{tpu_custom_call.1} parent=5 // pred_check_branch
        %116 = sbr.rel (%p114) target = $region20
      $region19: #{tpu_custom_call.1} parent=5 // pred_region
        // Predicated region
        $region21: #{tpu_custom_call.1} parent=19 // pred_check
          %p117 = pneg %p56
        $region22: #{tpu_custom_call.1} parent=19 // pred_check_branch
          %119 = sbr.rel (%p117) target = $region24
        $region23: #{tpu_custom_call.1} parent=19 // pred_region
          %s120 = sand.u32 %s46, 1
          %s121 = scalar_lea.sflag [#allocation3], %s120
          %s122 = sand.u32 %s46, 1
          %s123 = smul.addr %s122, 128
          %s124 = scalar_lea.vmem [#allocation6], %s123
          %s125 = smul.u32 2, %s15
          %127 = vsyncadd %s121, 0
          %s128 = smul.addr %s125, 8
          %s129 = smul.addr %s128, 8
          %s130 = scalar_lea.hbm %s1, %s129
          %s131 = sshll.u32 %s130, 4
          %s132 = int_to_ptr.hbm [resolvable:$true] %s131
          %s133 = sshll.u32 %s124, 4
          %s134 = int_to_ptr.vmem [resolvable:$true] %s133
          %139 = dma.hbm_to_vmem [thread:$0]  %s132, 2048, %s134, %s121, 1024, 1024, 64
        $region24: #{tpu_custom_call.1} parent=19 // pred_fallthru
          _
      $region20: #{tpu_custom_call.1} parent=5 // pred_fallthru
        _
      %p140 = scmp.le.s32.totalorder 1, %s15
      %p141 = scmp.lt.s32.totalorder %s15, 5
      %p142 = pnand %p140, %p141
      %p143 = pneg %p142
      // Predicated region
      $region25: #{tpu_custom_call.1} parent=5 // pred_check
        _
      $region26: #{tpu_custom_call.1} parent=5 // pred_check_branch
        %145 = sbr.rel (%p142) target = $region28
      $region27: #{tpu_custom_call.1} parent=5 // pred_region
        %s146 = ssub.s32 %s15, 1
        // Predicated region
        $region29: #{tpu_custom_call.1} parent=27 // pred_check
          %p147 = pneg %p36
        $region30: #{tpu_custom_call.1} parent=27 // pred_check_branch
          %149 = sbr.rel (%p147) target = $region32
        $region31: #{tpu_custom_call.1} parent=27 // pred_region
          %151 = dma.done [#allocation5], 16
        $region32: #{tpu_custom_call.1} parent=27 // pred_fallthru
          _
        %s152 = sand.u32 %s49, 1
        %s153 = scalar_lea.sflag [#allocation3], %s152
        %s154 = sand.u32 %s49, 1
        %s155 = smul.addr %s154, 128
        %s156 = scalar_lea.vmem [#allocation6], %s155
        // Predicated region
        $region33: #{tpu_custom_call.1} parent=27 // pred_check
          %p157 = pneg %p62
        $region34: #{tpu_custom_call.1} parent=27 // pred_check_branch
          %159 = sbr.rel (%p157) target = $region36
        $region35: #{tpu_custom_call.1} parent=27 // pred_region
          %161 = dma.done %s153, 2048
        $region36: #{tpu_custom_call.1} parent=27 // pred_fallthru
          _
        %162 = sfence
        %p163 = pneg %p36
        %p164 = pneg %p33
        %s165 = sand.u32 %s49, 1
        %s166 = scalar_lea.sflag [#allocation3], %s165
        %s167 = sand.u32 %s49, 1
        %s168 = smul.addr %s167, 128
        %s169 = scalar_lea.vmem [#allocation6], %s168
        %p170 = pneg %p62
        %p171 = pneg %p59
        %p172 = pneg %p88
        %p173 = pneg %p85
        %s174 = sand.u32 %s75, 1
        %s175 = scalar_lea.sflag [#allocation4], %s174
        %s176 = sand.u32 %s75, 1
        %s177 = smul.addr %s176, 128
        %s178 = scalar_lea.vmem [#allocation7], %s177
        %s179 = smul.u32 2, %s20
        %s180 = smul.u32 2, %s20
        %v181 = vld [vmem:[%s156] sm:$0xff]
        %v182 = vld [vmem:[%s156 + $0x8] sm:$0xff]
        %v183 = vld [vmem:[%s156 + $0x10] sm:$0xff]
        %v184 = vld [vmem:[%s156 + $0x18] sm:$0xff]
        %v185 = vld [vmem:[%s156 + $0x20] sm:$0xff]
        %v186 = vld [vmem:[%s156 + $0x28] sm:$0xff]
        %v187 = vld [vmem:[%s156 + $0x30] sm:$0xff]
        %v188 = vld [vmem:[%s156 + $0x38] sm:$0xff]
        %v189 = vld [vmem:[%s156 + $0x40] sm:$0xff]
        %v190 = vld [vmem:[%s156 + $0x48] sm:$0xff]
        %v191 = vld [vmem:[%s156 + $0x50] sm:$0xff]
        %v192 = vld [vmem:[%s156 + $0x58] sm:$0xff]
        %v193 = vld [vmem:[%s156 + $0x60] sm:$0xff]
        %v194 = vld [vmem:[%s156 + $0x68] sm:$0xff]
        %v195 = vld [vmem:[%s156 + $0x70] sm:$0xff]
        %v196 = vld [vmem:[%s156 + $0x78] sm:$0xff]
        %s197 = sld [smem:[#allocation2]]
        %s198 = sld [smem:[#allocation2 + $0x1]]
        %s199 = sld [smem:[#allocation2 + $0x2]]
        %s200 = sld [smem:[#allocation2 + $0x3]]
        %v201 = vstv %s200
        %v202 = vmul.f32 %v181, %v201
        %v203 = vmul.f32 %v182, %v201
        %v204 = vmul.f32 %v183, %v201
        %v205 = vmul.f32 %v184, %v201
        %v206 = vmul.f32 %v185, %v201
        %v207 = vmul.f32 %v186, %v201
        %v208 = vmul.f32 %v187, %v201
        %v209 = vmul.f32 %v188, %v201
        %v210 = vmul.f32 %v189, %v201
        %v211 = vmul.f32 %v190, %v201
        %v212 = vmul.f32 %v191, %v201
        %v213 = vmul.f32 %v192, %v201
        %v214 = vmul.f32 %v193, %v201
        %v215 = vmul.f32 %v194, %v201
        %v216 = vmul.f32 %v195, %v201
        %v217 = vmul.f32 %v196, %v201
        %v218 = vstv %s199
        %v219 = vadd.f32 %v202, %v218
        %v220 = vadd.f32 %v203, %v218
        %v221 = vadd.f32 %v204, %v218
        %v222 = vadd.f32 %v205, %v218
        %v223 = vadd.f32 %v206, %v218
        %v224 = vadd.f32 %v207, %v218
        %v225 = vadd.f32 %v208, %v218
        %v226 = vadd.f32 %v209, %v218
        %v227 = vadd.f32 %v210, %v218
        %v228 = vadd.f32 %v211, %v218
        %v229 = vadd.f32 %v212, %v218
        %v230 = vadd.f32 %v213, %v218
        %v231 = vadd.f32 %v214, %v218
        %v232 = vadd.f32 %v215, %v218
        %v233 = vadd.f32 %v216, %v218
        %v234 = vadd.f32 %v217, %v218
        %v235 = vmul.f32 %v219, %v181
        %v236 = vmul.f32 %v220, %v182
        %v237 = vmul.f32 %v221, %v183
        %v238 = vmul.f32 %v222, %v184
        %v239 = vmul.f32 %v223, %v185
        %v240 = vmul.f32 %v224, %v186
        %v241 = vmul.f32 %v225, %v187
        %v242 = vmul.f32 %v226, %v188
        %v243 = vmul.f32 %v227, %v189
        %v244 = vmul.f32 %v228, %v190
        %v245 = vmul.f32 %v229, %v191
        %v246 = vmul.f32 %v230, %v192
        %v247 = vmul.f32 %v231, %v193
        %v248 = vmul.f32 %v232, %v194
        %v249 = vmul.f32 %v233, %v195
        %v250 = vmul.f32 %v234, %v196
        %v251 = vstv %s198
        %v252 = vadd.f32 %v235, %v251
        %v253 = vadd.f32 %v236, %v251
        %v254 = vadd.f32 %v237, %v251
        %v255 = vadd.f32 %v238, %v251
        %v256 = vadd.f32 %v239, %v251
        %v257 = vadd.f32 %v240, %v251
        %v258 = vadd.f32 %v241, %v251
        %v259 = vadd.f32 %v242, %v251
        %v260 = vadd.f32 %v243, %v251
        %v261 = vadd.f32 %v244, %v251
        %v262 = vadd.f32 %v245, %v251
        %v263 = vadd.f32 %v246, %v251
        %v264 = vadd.f32 %v247, %v251
        %v265 = vadd.f32 %v248, %v251
        %v266 = vadd.f32 %v249, %v251
        %v267 = vadd.f32 %v250, %v251
        %v268 = vmul.f32 %v252, %v181
        %v269 = vmul.f32 %v253, %v182
        %v270 = vmul.f32 %v254, %v183
        %v271 = vmul.f32 %v255, %v184
        %v272 = vmul.f32 %v256, %v185
        %v273 = vmul.f32 %v257, %v186
        %v274 = vmul.f32 %v258, %v187
        %v275 = vmul.f32 %v259, %v188
        %v276 = vmul.f32 %v260, %v189
        %v277 = vmul.f32 %v261, %v190
        %v278 = vmul.f32 %v262, %v191
        %v279 = vmul.f32 %v263, %v192
        %v280 = vmul.f32 %v264, %v193
        %v281 = vmul.f32 %v265, %v194
        %v282 = vmul.f32 %v266, %v195
        %v283 = vmul.f32 %v267, %v196
        %v284 = vstv %s197
        %v285 = vadd.f32 %v268, %v284
        %v286 = vadd.f32 %v269, %v284
        %v287 = vadd.f32 %v270, %v284
        %v288 = vadd.f32 %v271, %v284
        %v289 = vadd.f32 %v272, %v284
        %v290 = vadd.f32 %v273, %v284
        %v291 = vadd.f32 %v274, %v284
        %v292 = vadd.f32 %v275, %v284
        %v293 = vadd.f32 %v276, %v284
        %v294 = vadd.f32 %v277, %v284
        %v295 = vadd.f32 %v278, %v284
        %v296 = vadd.f32 %v279, %v284
        %v297 = vadd.f32 %v280, %v284
        %v298 = vadd.f32 %v281, %v284
        %v299 = vadd.f32 %v282, %v284
        %v300 = vadd.f32 %v283, %v284
        %301 = vst [vmem:[%s178] sm:$0xff] %v285
        %302 = vst [vmem:[%s178 + $0x8] sm:$0xff] %v286
        %303 = vst [vmem:[%s178 + $0x10] sm:$0xff] %v287
        %304 = vst [vmem:[%s178 + $0x18] sm:$0xff] %v288
        %305 = vst [vmem:[%s178 + $0x20] sm:$0xff] %v289
        %306 = vst [vmem:[%s178 + $0x28] sm:$0xff] %v290
        %307 = vst [vmem:[%s178 + $0x30] sm:$0xff] %v291
        %308 = vst [vmem:[%s178 + $0x38] sm:$0xff] %v292
        %309 = vst [vmem:[%s178 + $0x40] sm:$0xff] %v293
        %310 = vst [vmem:[%s178 + $0x48] sm:$0xff] %v294
        %311 = vst [vmem:[%s178 + $0x50] sm:$0xff] %v295
        %312 = vst [vmem:[%s178 + $0x58] sm:$0xff] %v296
        %313 = vst [vmem:[%s178 + $0x60] sm:$0xff] %v297
        %314 = vst [vmem:[%s178 + $0x68] sm:$0xff] %v298
        %315 = vst [vmem:[%s178 + $0x70] sm:$0xff] %v299
        %316 = vst [vmem:[%s178 + $0x78] sm:$0xff] %v300
        %s317 = sand.u32 %s75, 1
        %s318 = scalar_lea.sflag [#allocation4], %s317
        %s319 = sand.u32 %s75, 1
        %s320 = smul.addr %s319, 128
        %s321 = scalar_lea.vmem [#allocation7], %s320
        // Predicated region
        $region37: #{tpu_custom_call.1} parent=27 // pred_check
          %p322 = pneg %p85
        $region38: #{tpu_custom_call.1} parent=27 // pred_check_branch
          %324 = sbr.rel (%p322) target = $region40
        $region39: #{tpu_custom_call.1} parent=27 // pred_region
          %s325 = smul.u32 2, %s20
          %327 = vsyncadd %s318, 0
          %s328 = smul.addr %s325, 8
          %s329 = smul.addr %s328, 8
          %s330 = scalar_lea.hbm %s2, %s329
          %s331 = sshll.u32 %s321, 4
          %s332 = int_to_ptr.vmem [resolvable:$true] %s331
          %s333 = sshll.u32 %s330, 4
          %s334 = int_to_ptr.hbm [resolvable:$true] %s333
          %339 = dma.vmem_to_hbm [thread:$0]  %s332, 2048, %s334, %s318, 1024, 1024, 64
        $region40: #{tpu_custom_call.1} parent=27 // pred_fallthru
          _
      $region28: #{tpu_custom_call.1} parent=5 // pred_fallthru
        _
      %p340 = scmp.le.s32.totalorder 2, %s15
      // Predicated region
      $region41: #{tpu_custom_call.1} parent=5 // pred_check
        %p341 = pneg %p340
      $region42: #{tpu_custom_call.1} parent=5 // pred_check_branch
        %343 = sbr.rel (%p341) target = $region44
      $region43: #{tpu_custom_call.1} parent=5 // pred_region
        %s344 = ssub.s32 %s15, 2
        // Predicated region
        $region45: #{tpu_custom_call.1} parent=43 // pred_check
          %p345 = pneg %p91
        $region46: #{tpu_custom_call.1} parent=43 // pred_check_branch
          %347 = sbr.rel (%p345) target = $region48
        $region47: #{tpu_custom_call.1} parent=43 // pred_region
          %s348 = sand.u32 %s76, 1
          %s349 = scalar_lea.sflag [#allocation4], %s348
          %s350 = sand.u32 %s76, 1
          %s351 = smul.addr %s350, 128
          %s352 = scalar_lea.vmem [#allocation7], %s351
          %354 = dma.done %s349, 2048
        $region48: #{tpu_custom_call.1} parent=43 // pred_fallthru
          _
      $region44: #{tpu_custom_call.1} parent=5 // pred_fallthru
        _
    $region6: #{tpu_custom_call.1} parent=1 // loop_footer
      %s19 = sadd.s32 1, %s15
    $region7: #{tpu_custom_call.1} parent=1 // loop_footer_branch
      %14 = sbr.rel target = $region3
    $region8: #{tpu_custom_call.1} parent=1 // loop_exit
      _
    %355 = vsyncpa [#allocation3], 1
    %s356 = scalar_lea.sflag [#allocation3], 1
    %357 = vsyncpa %s356, 1
    %358 = vsyncpa [#allocation4], 1
    %s359 = scalar_lea.sflag [#allocation4], 1
    %360 = vsyncpa %s359, 1
    %361 = vsyncpa [#allocation5], 1
    %s362 = scalar_lea.sflag [#allocation5], 1
    %363 = vsyncpa %s362, 1

</llo_original>
